<compile_context>
chip_gen: v7x
topology: tpu7x:2x2x1
jax: 0.10.0
libtpu: 0.0.40
codegen_flags: <defaults>
</compile_context>

<pallas_src>
import functools

import jax
import jax.numpy as jnp
from jax.experimental import pallas as pl
from jax.experimental.pallas import tpu as pltpu

LANE = 128  # TPU lane width; all feature dims and N are padded to this.


def gcn_kernel(anorm_ref, x_ref, w_ref, b_ref, out_ref):
    """Fused 2-layer GCN forward. All operands are full arrays resident in VMEM.

    Shapes (already padded in the wrapper, n_pad = multiple of 128):
      anorm: (n_pad, n_pad)   x: (n_pad, 128)
      w:     (2, 128, 128)    b: (2, 1, 128)
      out:   (n_pad, 128)     (valid classes in the first C lanes)
    """
    anorm = anorm_ref[...]                     # (n_pad, n_pad) f32
    x = x_ref[...]                             # (n_pad, 128)   f32

    # ---- Layer 1: GraphConv(in_feats -> h_feats) + ReLU ------------------------
    agg1 = jnp.dot(anorm, x, preferred_element_type=jnp.float32)        # (n_pad, 128)
    h1 = jnp.dot(agg1, w_ref[0], preferred_element_type=jnp.float32)    # (n_pad, 128)
    h1 = jnp.maximum(h1 + b_ref[0], 0.0)                                # bias + ReLU

    # ---- Layer 2: GraphConv(h_feats -> num_classes) ----------------------------
    agg2 = jnp.dot(anorm, h1, preferred_element_type=jnp.float32)       # (n_pad, 128)
    h2 = jnp.dot(agg2, w_ref[1], preferred_element_type=jnp.float32)    # (n_pad, 128)
    h2 = h2 + b_ref[1]

    out_ref[...] = h2.astype(out_ref.dtype)    # unmasked, lane-dense store


def _pad_to(a, shape):
    """Zero-pad `a` up to `shape` (trailing pad on each axis)."""
    pads = [(0, t - s) for s, t in zip(a.shape, shape)]
    if all(p == (0, 0) for p in pads):
        return a
    return jnp.pad(a, pads)


def pack_params(w1, b1, w2, b2):
    """One-time (init-time) packing: pad + stack weights and biases.

    Returns w_packed (2, 128, 128) and b_packed (2, 1, 128), both f32.
    Done once so the per-call forward never re-pads static parameters.
    """
    w_packed = jnp.stack([_pad_to(w1.astype(jnp.float32), (LANE, LANE)),
                          _pad_to(w2.astype(jnp.float32), (LANE, LANE))])
    b_packed = jnp.stack([_pad_to(b1.reshape(1, -1).astype(jnp.float32), (1, LANE)),
                          _pad_to(b2.reshape(1, -1).astype(jnp.float32), (1, LANE))])
    return w_packed, b_packed


@functools.partial(jax.jit, static_argnames=("n", "num_classes"))
def gcn_forward(anorm, x, w_packed, b_packed, *, n, num_classes):
    """Jitted forward: pad activations, run the fused Pallas call, slice back."""
    n_pad = max(LANE, pl.cdiv(n, LANE) * LANE)

    # Activation padding (fused by XLA under jit; zero pads are exact).
    anorm_p = _pad_to(anorm, (n_pad, n_pad))
    x_p = _pad_to(x, (n_pad, LANE))

    # Advisory cost hint — padded bytes/flops actually moved/executed.
    flops = 2 * (2 * n_pad * n_pad * LANE      # two A @ (.) aggregations
                 + 2 * n_pad * LANE * LANE)    # two (.) @ W projections
    bytes_accessed = 4 * (n_pad * n_pad        # anorm
                          + n_pad * LANE       # x
                          + 2 * LANE * LANE    # w_packed
                          + 2 * LANE           # b_packed
                          + n_pad * LANE)      # out
    cost = pl.CostEstimate(flops=flops, transcendentals=0,
                           bytes_accessed=bytes_accessed)

    vmem_spec = pl.BlockSpec(memory_space=pltpu.MemorySpace.VMEM)
    out_padded = pl.pallas_call(
        gcn_kernel,
        out_shape=jax.ShapeDtypeStruct((n_pad, LANE), jnp.float32),
        in_specs=[vmem_spec] * 4,
        out_specs=vmem_spec,
        cost_estimate=cost,
        compiler_params=pltpu.CompilerParams(vmem_limit_bytes=4 * 1024 * 1024),
    )(anorm_p, x_p, w_packed, b_packed)

    return out_padded[:n, :num_classes]


def make_normalized_adjacency(key, n, edge_prob=0.15):
    """Deterministic random undirected graph with symmetric GCN normalization
    D^{-1/2} A D^{-1/2}, degrees clamped to >= 1 (DGL norm='both')."""
    upper = (jax.random.uniform(key, (n, n)) < edge_prob).astype(jnp.float32)
    upper = jnp.triu(upper, k=1)
    adj = upper + upper.T                      # symmetric, no self-loops
    deg = jnp.maximum(adj.sum(axis=1), 1.0)
    d_inv_sqrt = 1.0 / jnp.sqrt(deg)
    return adj * d_inv_sqrt[:, None] * d_inv_sqrt[None, :]


def reference_forward(anorm, x, w1, b1, w2, b2):
    h = anorm @ x @ w1 + b1
    h = jnp.maximum(h, 0.0)
    return anorm @ h @ w2 + b2


if __name__ == "__main__":
    # Small shapes: 64 nodes, in_feats=16, h_feats=32, num_classes=8
    N, IN_FEATS, H_FEATS, NUM_CLASSES = 64, 16, 32, 8

    key = jax.random.PRNGKey(0)
    k_adj, k_x, k_w1, k_w2 = jax.random.split(key, 4)

    anorm = make_normalized_adjacency(k_adj, N)
    x = jax.random.normal(k_x, (N, IN_FEATS), dtype=jnp.float32)

    # Deterministic parameter init (Glorot-like scaling), zero biases as in DGL init.
    w1 = jax.random.normal(k_w1, (IN_FEATS, H_FEATS), dtype=jnp.float32) * (
        1.0 / jnp.sqrt(IN_FEATS)
    )
    b1 = jnp.zeros((H_FEATS,), dtype=jnp.float32)
    w2 = jax.random.normal(k_w2, (H_FEATS, NUM_CLASSES), dtype=jnp.float32) * (
        1.0 / jnp.sqrt(H_FEATS)
    )
    b2 = jnp.zeros((NUM_CLASSES,), dtype=jnp.float32)

    # One-time parameter packing/padding (hoisted out of the per-call path).
    w_packed, b_packed = pack_params(w1, b1, w2, b2)
    w_packed, b_packed = jax.block_until_ready((w_packed, b_packed))

    out = gcn_forward(anorm, x, w_packed, b_packed, n=N, num_classes=NUM_CLASSES)
    jax.block_until_ready(out)

    ref = reference_forward(anorm, x, w1, b1, w2, b2)
    assert out.shape == (N, NUM_CLASSES)
    assert jnp.allclose(out, ref, atol=1e-4, rtol=1e-4), "mismatch vs JAX reference"

    print("KERNEL_OK")
</pallas_src>

<mosaic_0001>
module attributes {stable_mosaic.version = 11 : i64} {
  func.func @gcn_kernel(%arg0: memref<128x128xf32, #tpu.memory_space<vmem>>, %arg1: memref<128x128xf32, #tpu.memory_space<vmem>>, %arg2: memref<2x128x128xf32, #tpu.memory_space<vmem>>, %arg3: memref<2x1x128xf32, #tpu.memory_space<vmem>>, %arg4: memref<128x128xf32, #tpu.memory_space<vmem>>) attributes {dimension_semantics = [], scalar_prefetch = 0 : i64, scratch_operands = 0 : i64, tpu.core_type = #tpu.core_type<tc>} {
    %c0 = arith.constant 0 : index
    %c0_0 = arith.constant 0 : index
    %0 = vector.load %arg0[%c0, %c0_0] : memref<128x128xf32, #tpu.memory_space<vmem>>, vector<128x128xf32>
    %c0_1 = arith.constant 0 : index
    %c0_2 = arith.constant 0 : index
    %1 = vector.load %arg1[%c0_1, %c0_2] : memref<128x128xf32, #tpu.memory_space<vmem>>, vector<128x128xf32>
    %cst = arith.constant dense<0.000000e+00> : vector<128x128xf32>
    %2 = tpu.matmul %0, %1, %cst {dimension_numbers = #tpu.dot_dimension_numbers<[1], [0], [0], [1], [0, 0, 1, 1], [], []>} : vector<128x128xf32>, vector<128x128xf32>, vector<128x128xf32> -> vector<128x128xf32>
    %c0_3 = arith.constant 0 : index
    %c0_4 = arith.constant 0 : index
    %c0_5 = arith.constant 0 : index
    %3 = vector.load %arg2[%c0_3, %c0_4, %c0_5] : memref<2x128x128xf32, #tpu.memory_space<vmem>>, vector<1x128x128xf32>
    %4 = vector.shape_cast %3 : vector<1x128x128xf32> to vector<128x128xf32>
    %cst_6 = arith.constant dense<0.000000e+00> : vector<128x128xf32>
    %5 = tpu.matmul %2, %4, %cst_6 {dimension_numbers = #tpu.dot_dimension_numbers<[1], [0], [0], [1], [0, 0, 1, 1], [], []>} : vector<128x128xf32>, vector<128x128xf32>, vector<128x128xf32> -> vector<128x128xf32>
    %c0_7 = arith.constant 0 : index
    %c0_8 = arith.constant 0 : index
    %c0_9 = arith.constant 0 : index
    %6 = vector.load %arg3[%c0_7, %c0_8, %c0_9] : memref<2x1x128xf32, #tpu.memory_space<vmem>>, vector<1x1x128xf32>
    %7 = vector.shape_cast %6 : vector<1x1x128xf32> to vector<1x128xf32>
    %8 = vector.broadcast %7 : vector<1x128xf32> to vector<128x128xf32>
    %9 = arith.addf %5, %8 : vector<128x128xf32>
    %cst_10 = arith.constant 0.000000e+00 : f32
    %10 = vector.broadcast %cst_10 : f32 to vector<128x128xf32>
    %11 = arith.maximumf %9, %10 : vector<128x128xf32>
    %cst_11 = arith.constant dense<0.000000e+00> : vector<128x128xf32>
    %12 = tpu.matmul %0, %11, %cst_11 {dimension_numbers = #tpu.dot_dimension_numbers<[1], [0], [0], [1], [0, 0, 1, 1], [], []>} : vector<128x128xf32>, vector<128x128xf32>, vector<128x128xf32> -> vector<128x128xf32>
    %c1 = arith.constant 1 : index
    %c0_12 = arith.constant 0 : index
    %c0_13 = arith.constant 0 : index
    %13 = vector.load %arg2[%c1, %c0_12, %c0_13] : memref<2x128x128xf32, #tpu.memory_space<vmem>>, vector<1x128x128xf32>
    %14 = vector.shape_cast %13 : vector<1x128x128xf32> to vector<128x128xf32>
    %cst_14 = arith.constant dense<0.000000e+00> : vector<128x128xf32>
    %15 = tpu.matmul %12, %14, %cst_14 {dimension_numbers = #tpu.dot_dimension_numbers<[1], [0], [0], [1], [0, 0, 1, 1], [], []>} : vector<128x128xf32>, vector<128x128xf32>, vector<128x128xf32> -> vector<128x128xf32>
    %c1_15 = arith.constant 1 : index
    %c0_16 = arith.constant 0 : index
    %c0_17 = arith.constant 0 : index
    %16 = vector.load %arg3[%c1_15, %c0_16, %c0_17] : memref<2x1x128xf32, #tpu.memory_space<vmem>>, vector<1x1x128xf32>
    %17 = vector.shape_cast %16 : vector<1x1x128xf32> to vector<1x128xf32>
    %18 = vector.broadcast %17 : vector<1x128xf32> to vector<128x128xf32>
    %19 = arith.addf %15, %18 : vector<128x128xf32>
    %c0_18 = arith.constant 0 : index
    %c0_19 = arith.constant 0 : index
    %20 = vector.load %arg4[%c0_18, %c0_19] : memref<128x128xf32, #tpu.memory_space<vmem>>, vector<128x128xf32>
    tpu.vector_store %arg4[%c0_18, %c0_19], %19 {strides = array<i32>} : memref<128x128xf32, #tpu.memory_space<vmem>>, vector<128x128xf32>,
    return
  }
}

</mosaic_0001>

<llo_original>
// kernel: gcn_forward.1
$region0: #{gcn_forward.1}
  #allocation0 [shape = 'u32[]', space=smem, size = 0x4, offset = 0x4, fixed_abs, tag = 'smem constant byte address 0x4 - core index']
  #allocation1 [shape = 'u32[144,128]{1,0:T(1,128)}', space=vmem, size = 0x12000, scoped, tag = 'internal scratch']
  %s0 = inlined_call_operand.vmem [shape: f32[128,128], index: 0, kind: input, shape index: {}]
  %s1 = inlined_call_operand.vmem [shape: f32[128,128], index: 1, kind: input, shape index: {}]
  %s2 = inlined_call_operand.vmem [shape: f32[2,128,128], index: 2, kind: input, shape index: {}]
  %s3 = inlined_call_operand.vmem [shape: f32[2,1,128], index: 3, kind: input, shape index: {}]
  %s4 = inlined_call_operand.vmem [shape: f32[128,128], index: 4, kind: output, shape index: {}]
  %s5 = sld [smem:[#allocation0]]
  $region26: #{gcn_forward.1} parent=0
    _
  %s7 = ssub.s32 1, %s5
  %s8 = scalar_select 0, %s7, %s5
  // Predicated region
  $region2: #{gcn_forward.1} parent=0 // pred_check
    _
  $region3: #{gcn_forward.1} parent=0 // pred_check_branch
    %10 = sbr.rel (0) target = $region5
  $region4: #{gcn_forward.1} parent=0 // pred_region
    _
  $region5: #{gcn_forward.1} parent=0 // pred_fallthru
    _
  // Predicated region
  $region6: #{gcn_forward.1} parent=0 // pred_check
    _
  $region7: #{gcn_forward.1} parent=0 // pred_check_branch
    %12 = sbr.rel (0) target = $region9
  $region8: #{gcn_forward.1} parent=0 // pred_region
    _
  $region9: #{gcn_forward.1} parent=0 // pred_fallthru
    _
  // Predicated region
  $region10: #{gcn_forward.1} parent=0 // pred_check
    _
  $region11: #{gcn_forward.1} parent=0 // pred_check_branch
    %14 = sbr.rel (0) target = $region13
  $region12: #{gcn_forward.1} parent=0 // pred_region
    _
  $region13: #{gcn_forward.1} parent=0 // pred_fallthru
    _
  // Predicated region
  $region14: #{gcn_forward.1} parent=0 // pred_check
    _
  $region15: #{gcn_forward.1} parent=0 // pred_check_branch
    %16 = sbr.rel (0) target = $region17
  $region16: #{gcn_forward.1} parent=0 // pred_region
    _
  $region17: #{gcn_forward.1} parent=0 // pred_fallthru
    _
  %v17 = vld [vmem:[%s0] sm:$0xff]
  %v18 = vld [vmem:[%s0 + $0x8] sm:$0xff]
  %v19 = vld [vmem:[%s0 + $0x10] sm:$0xff]
  %v20 = vld [vmem:[%s0 + $0x18] sm:$0xff]
  %v21 = vld [vmem:[%s0 + $0x20] sm:$0xff]
  %v22 = vld [vmem:[%s0 + $0x28] sm:$0xff]
  %v23 = vld [vmem:[%s0 + $0x30] sm:$0xff]
  %v24 = vld [vmem:[%s0 + $0x38] sm:$0xff]
  %v25 = vld [vmem:[%s0 + $0x40] sm:$0xff]
  %v26 = vld [vmem:[%s0 + $0x48] sm:$0xff]
  %v27 = vld [vmem:[%s0 + $0x50] sm:$0xff]
  %v28 = vld [vmem:[%s0 + $0x58] sm:$0xff]
  %v29 = vld [vmem:[%s0 + $0x60] sm:$0xff]
  %v30 = vld [vmem:[%s0 + $0x68] sm:$0xff]
  %v31 = vld [vmem:[%s0 + $0x70] sm:$0xff]
  %v32 = vld [vmem:[%s0 + $0x78] sm:$0xff]
  %v33 = vld [vmem:[%s1] sm:$0xff]
  %v34 = vld [vmem:[%s1 + $0x8] sm:$0xff]
  %v35 = vld [vmem:[%s1 + $0x10] sm:$0xff]
  %v36 = vld [vmem:[%s1 + $0x18] sm:$0xff]
  %v37 = vld [vmem:[%s1 + $0x20] sm:$0xff]
  %v38 = vld [vmem:[%s1 + $0x28] sm:$0xff]
  %v39 = vld [vmem:[%s1 + $0x30] sm:$0xff]
  %v40 = vld [vmem:[%s1 + $0x38] sm:$0xff]
  %v41 = vld [vmem:[%s1 + $0x40] sm:$0xff]
  %v42 = vld [vmem:[%s1 + $0x48] sm:$0xff]
  %v43 = vld [vmem:[%s1 + $0x50] sm:$0xff]
  %v44 = vld [vmem:[%s1 + $0x58] sm:$0xff]
  %v45 = vld [vmem:[%s1 + $0x60] sm:$0xff]
  %v46 = vld [vmem:[%s1 + $0x68] sm:$0xff]
  %v47 = vld [vmem:[%s1 + $0x70] sm:$0xff]
  %v48 = vld [vmem:[%s1 + $0x78] sm:$0xff]
  %49 = vmatprep.subr.mxu0 0.0
  %50 = vmatpush1.msra.mxu0 %v33
  %51 = vmatprep.subr.mxu0 0.0
  %52 = vmatpush1.msra.mxu0 %v34
  %53 = vmatprep.subr.mxu0 0.0
  %54 = vmatpush1.msra.mxu0 %v35
  %55 = vmatprep.subr.mxu0 0.0
  %56 = vmatpush1.msra.mxu0 %v36
  %57 = vmatprep.subr.mxu0 0.0
  %58 = vmatpush1.msra.mxu0 %v37
  %59 = vmatprep.subr.mxu0 0.0
  %60 = vmatpush1.msra.mxu0 %v38
  %61 = vmatprep.subr.mxu0 0.0
  %62 = vmatpush1.msra.mxu0 %v39
  %63 = vmatprep.subr.mxu0 0.0
  %64 = vmatpush1.msra.mxu0 %v40
  %65 = vmatprep.subr.mxu0 0.0
  %66 = vmatpush1.msra.mxu0 %v41
  %67 = vmatprep.subr.mxu0 0.0
  %68 = vmatpush1.msra.mxu0 %v42
  %69 = vmatprep.subr.mxu0 0.0
  %70 = vmatpush1.msra.mxu0 %v43
  %71 = vmatprep.subr.mxu0 0.0
  %72 = vmatpush1.msra.mxu0 %v44
  %73 = vmatprep.subr.mxu0 0.0
  %74 = vmatpush1.msra.mxu0 %v45
  %75 = vmatprep.subr.mxu0 0.0
  %76 = vmatpush1.msra.mxu0 %v46
  %77 = vmatprep.subr.mxu0 0.0
  %78 = vmatpush1.msra.mxu0 %v47
  %79 = vmatprep.subr.mxu0 0.0
  %80 = vmatpush1.msra.mxu0 %v48
  %81 = vmatprep.subr.mxu0 0.0
  %82 = vmatpush1.msra.mxu0 0.0
  %83 = vmatprep.subr.mxu0 0.0
  %84 = vmatpush1.msra.mxu0 0.0
  %85 = vmatprep.subr.mxu0 0.0
  %86 = vmatpush1.msra.mxu0 0.0
  %87 = vmatprep.subr.mxu0 0.0
  %88 = vmatpush1.msra.mxu0 0.0
  %89 = vmatprep.subr.mxu0 0.0
  %90 = vmatpush1.msra.mxu0 0.0
  %91 = vmatprep.subr.mxu0 0.0
  %92 = vmatpush1.msra.mxu0 0.0
  %93 = vmatprep.subr.mxu0 0.0
  %94 = vmatpush1.msra.mxu0 0.0
  %95 = vmatprep.subr.mxu0 0.0
  %96 = vmatpush1.msra.mxu0 0.0
  %97 = vmatprep.subr.mxu0 0.0
  %98 = vmatpush1.msra.mxu0 0.0
  %99 = vmatprep.subr.mxu0 0.0
  %100 = vmatpush1.msra.mxu0 0.0
  %101 = vmatprep.subr.mxu0 0.0
  %102 = vmatpush1.msra.mxu0 0.0
  %103 = vmatprep.subr.mxu0 0.0
  %104 = vmatpush1.msra.mxu0 0.0
  %105 = vmatprep.subr.mxu0 0.0
  %106 = vmatpush1.msra.mxu0 0.0
  %107 = vmatprep.subr.mxu0 0.0
  %108 = vmatpush1.msra.mxu0 0.0
  %109 = vmatprep.subr.mxu0 0.0
  %110 = vmatpush1.msra.mxu0 0.0
  %111 = vmatprep.subr.mxu0 0.0
  %112 = vmatpush1.msra.mxu0 0.0
  %113 = vmatprep.mubr.f32.mxu0 0.0
  %114 = vmatmul.mubr.f32.gmra.mrb[0].mxu0 %v17
  %v115 = vpop.f32.mrb[0].mxu0
  %v116 = vadd.f32 0.0, %v115
  %v117 = vpop.f32.mrb[0].mxu0
  %118 = vmatprep.mubr.f32.mxu0 0.0
  %119 = vmatmul.mubr.f32.gmra.mrb[0].mxu0 %v18
  %v120 = vpop.f32.mrb[0].mxu0
  %v121 = vadd.f32 0.0, %v120
  %v122 = vpop.f32.mrb[0].mxu0
  %123 = vmatprep.mubr.f32.mxu0 0.0
  %124 = vmatmul.mubr.f32.gmra.mrb[0].mxu0 %v19
  %v125 = vpop.f32.mrb[0].mxu0
  %v126 = vadd.f32 0.0, %v125
  %v127 = vpop.f32.mrb[0].mxu0
  %128 = vmatprep.mubr.f32.mxu0 0.0
  %129 = vmatmul.mubr.f32.gmra.mrb[0].mxu0 %v20
  %v130 = vpop.f32.mrb[0].mxu0
  %v131 = vadd.f32 0.0, %v130
  %v132 = vpop.f32.mrb[0].mxu0
  %133 = vmatprep.mubr.f32.mxu0 0.0
  %134 = vmatmul.mubr.f32.gmra.mrb[0].mxu0 %v21
  %v135 = vpop.f32.mrb[0].mxu0
  %v136 = vadd.f32 0.0, %v135
  %v137 = vpop.f32.mrb[0].mxu0
  %138 = vmatprep.mubr.f32.mxu0 0.0
  %139 = vmatmul.mubr.f32.gmra.mrb[0].mxu0 %v22
  %v140 = vpop.f32.mrb[0].mxu0
  %v141 = vadd.f32 0.0, %v140
  %v142 = vpop.f32.mrb[0].mxu0
  %143 = vmatprep.mubr.f32.mxu0 0.0
  %144 = vmatmul.mubr.f32.gmra.mrb[0].mxu0 %v23
  %v145 = vpop.f32.mrb[0].mxu0
  %v146 = vadd.f32 0.0, %v145
  %v147 = vpop.f32.mrb[0].mxu0
  %148 = vmatprep.mubr.f32.mxu0 0.0
  %149 = vmatmul.mubr.f32.gmra.mrb[0].mxu0 %v24
  %v150 = vpop.f32.mrb[0].mxu0
  %v151 = vadd.f32 0.0, %v150
  %v152 = vpop.f32.mrb[0].mxu0
  %153 = vmatprep.mubr.f32.mxu0 0.0
  %154 = vmatmul.mubr.f32.gmra.mrb[0].mxu0 %v25
  %v155 = vpop.f32.mrb[0].mxu0
  %v156 = vadd.f32 0.0, %v155
  %v157 = vpop.f32.mrb[0].mxu0
  %158 = vmatprep.mubr.f32.mxu0 0.0
  %159 = vmatmul.mubr.f32.gmra.mrb[0].mxu0 %v26
  %v160 = vpop.f32.mrb[0].mxu0
  %v161 = vadd.f32 0.0, %v160
  %v162 = vpop.f32.mrb[0].mxu0
  %163 = vmatprep.mubr.f32.mxu0 0.0
  %164 = vmatmul.mubr.f32.gmra.mrb[0].mxu0 %v27
  %v165 = vpop.f32.mrb[0].mxu0
  %v166 = vadd.f32 0.0, %v165
  %v167 = vpop.f32.mrb[0].mxu0
  %168 = vmatprep.mubr.f32.mxu0 0.0
  %169 = vmatmul.mubr.f32.gmra.mrb[0].mxu0 %v28
  %v170 = vpop.f32.mrb[0].mxu0
  %v171 = vadd.f32 0.0, %v170
  %v172 = vpop.f32.mrb[0].mxu0
  %173 = vmatprep.mubr.f32.mxu0 0.0
  %174 = vmatmul.mubr.f32.gmra.mrb[0].mxu0 %v29
  %v175 = vpop.f32.mrb[0].mxu0
  %v176 = vadd.f32 0.0, %v175
  %v177 = vpop.f32.mrb[0].mxu0
  %178 = vmatprep.mubr.f32.mxu0 0.0
  %179 = vmatmul.mubr.f32.gmra.mrb[0].mxu0 %v30
  %v180 = vpop.f32.mrb[0].mxu0
  %v181 = vadd.f32 0.0, %v180
  %v182 = vpop.f32.mrb[0].mxu0
  %183 = vmatprep.mubr.f32.mxu0 0.0
  %184 = vmatmul.mubr.f32.gmra.mrb[0].mxu0 %v31
  %v185 = vpop.f32.mrb[0].mxu0
  %v186 = vadd.f32 0.0, %v185
  %v187 = vpop.f32.mrb[0].mxu0
  %188 = vmatprep.mubr.f32.mxu0 0.0
  %189 = vmatmul.mubr.f32.gmra.mrb[0].mxu0 %v32
  %v190 = vpop.f32.mrb[0].mxu0
  %v191 = vadd.f32 0.0, %v190
  %v192 = vpop.f32.mrb[0].mxu0
  %193 = vdwg.mxu0
  %v194 = vld [vmem:[%s2] sm:$0xff]
  %v195 = vld [vmem:[%s2 + $0x8] sm:$0xff]
  %v196 = vld [vmem:[%s2 + $0x10] sm:$0xff]
  %v197 = vld [vmem:[%s2 + $0x18] sm:$0xff]
  %v198 = vld [vmem:[%s2 + $0x20] sm:$0xff]
  %v199 = vld [vmem:[%s2 + $0x28] sm:$0xff]
  %v200 = vld [vmem:[%s2 + $0x30] sm:$0xff]
  %v201 = vld [vmem:[%s2 + $0x38] sm:$0xff]
  %v202 = vld [vmem:[%s2 + $0x40] sm:$0xff]
  %v203 = vld [vmem:[%s2 + $0x48] sm:$0xff]
  %v204 = vld [vmem:[%s2 + $0x50] sm:$0xff]
  %v205 = vld [vmem:[%s2 + $0x58] sm:$0xff]
  %v206 = vld [vmem:[%s2 + $0x60] sm:$0xff]
  %v207 = vld [vmem:[%s2 + $0x68] sm:$0xff]
  %v208 = vld [vmem:[%s2 + $0x70] sm:$0xff]
  %v209 = vld [vmem:[%s2 + $0x78] sm:$0xff]
  %v210 = vld [vmem:[%s3] sm:$0x1]
  %v212 = vlaneseq
  %v213 = vshrl.u32 %v212, 7
  %v214 = vsub.s32 0, %v213
  %v215 = vrot.slane %v210, %v214
  %217 = vmatprep.subr.mxu0 0.0
  %218 = vmatpush1.msra.mxu0 %v194
  %219 = vmatprep.subr.mxu0 0.0
  %220 = vmatpush1.msra.mxu0 %v195
  %221 = vmatprep.subr.mxu0 0.0
  %222 = vmatpush1.msra.mxu0 %v196
  %223 = vmatprep.subr.mxu0 0.0
  %224 = vmatpush1.msra.mxu0 %v197
  %225 = vmatprep.subr.mxu0 0.0
  %226 = vmatpush1.msra.mxu0 %v198
  %227 = vmatprep.subr.mxu0 0.0
  %228 = vmatpush1.msra.mxu0 %v199
  %229 = vmatprep.subr.mxu0 0.0
  %230 = vmatpush1.msra.mxu0 %v200
  %231 = vmatprep.subr.mxu0 0.0
  %232 = vmatpush1.msra.mxu0 %v201
  %233 = vmatprep.subr.mxu0 0.0
  %234 = vmatpush1.msra.mxu0 %v202
  %235 = vmatprep.subr.mxu0 0.0
  %236 = vmatpush1.msra.mxu0 %v203
  %237 = vmatprep.subr.mxu0 0.0
  %238 = vmatpush1.msra.mxu0 %v204
  %239 = vmatprep.subr.mxu0 0.0
  %240 = vmatpush1.msra.mxu0 %v205
  %241 = vmatprep.subr.mxu0 0.0
  %242 = vmatpush1.msra.mxu0 %v206
  %243 = vmatprep.subr.mxu0 0.0
  %244 = vmatpush1.msra.mxu0 %v207
  %245 = vmatprep.subr.mxu0 0.0
  %246 = vmatpush1.msra.mxu0 %v208
  %247 = vmatprep.subr.mxu0 0.0
  %248 = vmatpush1.msra.mxu0 %v209
  %249 = vmatprep.subr.mxu0 0.0
  %250 = vmatpush1.msra.mxu0 0.0
  %251 = vmatprep.subr.mxu0 0.0
  %252 = vmatpush1.msra.mxu0 0.0
  %253 = vmatprep.subr.mxu0 0.0
  %254 = vmatpush1.msra.mxu0 0.0
  %255 = vmatprep.subr.mxu0 0.0
  %256 = vmatpush1.msra.mxu0 0.0
  %257 = vmatprep.subr.mxu0 0.0
  %258 = vmatpush1.msra.mxu0 0.0
  %259 = vmatprep.subr.mxu0 0.0
  %260 = vmatpush1.msra.mxu0 0.0
  %261 = vmatprep.subr.mxu0 0.0
  %262 = vmatpush1.msra.mxu0 0.0
  %263 = vmatprep.subr.mxu0 0.0
  %264 = vmatpush1.msra.mxu0 0.0
  %265 = vmatprep.subr.mxu0 0.0
  %266 = vmatpush1.msra.mxu0 0.0
  %267 = vmatprep.subr.mxu0 0.0
  %268 = vmatpush1.msra.mxu0 0.0
  %269 = vmatprep.subr.mxu0 0.0
  %270 = vmatpush1.msra.mxu0 0.0
  %271 = vmatprep.subr.mxu0 0.0
  %272 = vmatpush1.msra.mxu0 0.0
  %273 = vmatprep.subr.mxu0 0.0
  %274 = vmatpush1.msra.mxu0 0.0
  %275 = vmatprep.subr.mxu0 0.0
  %276 = vmatpush1.msra.mxu0 0.0
  %277 = vmatprep.subr.mxu0 0.0
  %278 = vmatpush1.msra.mxu0 0.0
  %279 = vmatprep.subr.mxu0 0.0
  %280 = vmatpush1.msra.mxu0 0.0
  %281 = vmatprep.mubr.f32.mxu0 0.0
  %282 = vmatmul.mubr.f32.gmra.mrb[0].mxu0 %v116
  %v283 = vpop.f32.mrb[0].mxu0
  %v284 = vadd.f32 %v215, %v283
  %v285 = vpop.f32.mrb[0].mxu0
  %286 = vmatprep.mubr.f32.mxu0 0.0
  %287 = vmatmul.mubr.f32.gmra.mrb[0].mxu0 %v121
  %v288 = vpop.f32.mrb[0].mxu0
  %v289 = vadd.f32 %v215, %v288
  %v290 = vpop.f32.mrb[0].mxu0
  %291 = vmatprep.mubr.f32.mxu0 0.0
  %292 = vmatmul.mubr.f32.gmra.mrb[0].mxu0 %v126
  %v293 = vpop.f32.mrb[0].mxu0
  %v294 = vadd.f32 %v215, %v293
  %v295 = vpop.f32.mrb[0].mxu0
  %296 = vmatprep.mubr.f32.mxu0 0.0
  %297 = vmatmul.mubr.f32.gmra.mrb[0].mxu0 %v131
  %v298 = vpop.f32.mrb[0].mxu0
  %v299 = vadd.f32 %v215, %v298
  %v300 = vpop.f32.mrb[0].mxu0
  %301 = vmatprep.mubr.f32.mxu0 0.0
  %302 = vmatmul.mubr.f32.gmra.mrb[0].mxu0 %v136
  %v303 = vpop.f32.mrb[0].mxu0
  %v304 = vadd.f32 %v215, %v303
  %v305 = vpop.f32.mrb[0].mxu0
  %306 = vmatprep.mubr.f32.mxu0 0.0
  %307 = vmatmul.mubr.f32.gmra.mrb[0].mxu0 %v141
  %v308 = vpop.f32.mrb[0].mxu0
  %v309 = vadd.f32 %v215, %v308
  %v310 = vpop.f32.mrb[0].mxu0
  %311 = vmatprep.mubr.f32.mxu0 0.0
  %312 = vmatmul.mubr.f32.gmra.mrb[0].mxu0 %v146
  %v313 = vpop.f32.mrb[0].mxu0
  %v314 = vadd.f32 %v215, %v313
  %v315 = vpop.f32.mrb[0].mxu0
  %316 = vmatprep.mubr.f32.mxu0 0.0
  %317 = vmatmul.mubr.f32.gmra.mrb[0].mxu0 %v151
  %v318 = vpop.f32.mrb[0].mxu0
  %v319 = vadd.f32 %v215, %v318
  %v320 = vpop.f32.mrb[0].mxu0
  %321 = vmatprep.mubr.f32.mxu0 0.0
  %322 = vmatmul.mubr.f32.gmra.mrb[0].mxu0 %v156
  %v323 = vpop.f32.mrb[0].mxu0
  %v324 = vadd.f32 %v215, %v323
  %v325 = vpop.f32.mrb[0].mxu0
  %326 = vmatprep.mubr.f32.mxu0 0.0
  %327 = vmatmul.mubr.f32.gmra.mrb[0].mxu0 %v161
  %v328 = vpop.f32.mrb[0].mxu0
  %v329 = vadd.f32 %v215, %v328
  %v330 = vpop.f32.mrb[0].mxu0
  %331 = vmatprep.mubr.f32.mxu0 0.0
  %332 = vmatmul.mubr.f32.gmra.mrb[0].mxu0 %v166
  %v333 = vpop.f32.mrb[0].mxu0
  %v334 = vadd.f32 %v215, %v333
  %v335 = vpop.f32.mrb[0].mxu0
  %336 = vmatprep.mubr.f32.mxu0 0.0
  %337 = vmatmul.mubr.f32.gmra.mrb[0].mxu0 %v171
  %v338 = vpop.f32.mrb[0].mxu0
  %v339 = vadd.f32 %v215, %v338
  %v340 = vpop.f32.mrb[0].mxu0
  %341 = vmatprep.mubr.f32.mxu0 0.0
  %342 = vmatmul.mubr.f32.gmra.mrb[0].mxu0 %v176
  %v343 = vpop.f32.mrb[0].mxu0
  %v344 = vadd.f32 %v215, %v343
  %v345 = vpop.f32.mrb[0].mxu0
  %346 = vmatprep.mubr.f32.mxu0 0.0
  %347 = vmatmul.mubr.f32.gmra.mrb[0].mxu0 %v181
  %v348 = vpop.f32.mrb[0].mxu0
  %v349 = vadd.f32 %v215, %v348
  %v350 = vpop.f32.mrb[0].mxu0
  %351 = vmatprep.mubr.f32.mxu0 0.0
  %352 = vmatmul.mubr.f32.gmra.mrb[0].mxu0 %v186
  %v353 = vpop.f32.mrb[0].mxu0
  %v354 = vadd.f32 %v215, %v353
  %v355 = vpop.f32.mrb[0].mxu0
  %356 = vmatprep.mubr.f32.mxu0 0.0
  %357 = vmatmul.mubr.f32.gmra.mrb[0].mxu0 %v191
  %v358 = vpop.f32.mrb[0].mxu0
  %v359 = vadd.f32 %v215, %v358
  %v360 = vpop.f32.mrb[0].mxu0
  %361 = vdwg.mxu0
  %v362 = vmax.f32 %v284, 0.0
  %v363 = vmax.f32 %v289, 0.0
  %v364 = vmax.f32 %v294, 0.0
  %v365 = vmax.f32 %v299, 0.0
  %v366 = vmax.f32 %v304, 0.0
  %v367 = vmax.f32 %v309, 0.0
  %v368 = vmax.f32 %v314, 0.0
  %v369 = vmax.f32 %v319, 0.0
  %v370 = vmax.f32 %v324, 0.0
  %v371 = vmax.f32 %v329, 0.0
  %v372 = vmax.f32 %v334, 0.0
  %v373 = vmax.f32 %v339, 0.0
  %v374 = vmax.f32 %v344, 0.0
  %v375 = vmax.f32 %v349, 0.0
  %v376 = vmax.f32 %v354, 0.0
  %v377 = vmax.f32 %v359, 0.0
  %378 = vmatprep.subr.mxu0 0.0
  %379 = vmatpush1.msra.mxu0 %v362
  %380 = vmatprep.subr.mxu0 0.0
  %381 = vmatpush1.msra.mxu0 %v363
  %382 = vmatprep.subr.mxu0 0.0
  %383 = vmatpush1.msra.mxu0 %v364
  %384 = vmatprep.subr.mxu0 0.0
  %385 = vmatpush1.msra.mxu0 %v365
  %386 = vmatprep.subr.mxu0 0.0
  %387 = vmatpush1.msra.mxu0 %v366
  %388 = vmatprep.subr.mxu0 0.0
  %389 = vmatpush1.msra.mxu0 %v367
  %390 = vmatprep.subr.mxu0 0.0
  %391 = vmatpush1.msra.mxu0 %v368
  %392 = vmatprep.subr.mxu0 0.0
  %393 = vmatpush1.msra.mxu0 %v369
  %394 = vmatprep.subr.mxu0 0.0
  %395 = vmatpush1.msra.mxu0 %v370
  %396 = vmatprep.subr.mxu0 0.0
  %397 = vmatpush1.msra.mxu0 %v371
  %398 = vmatprep.subr.mxu0 0.0
  %399 = vmatpush1.msra.mxu0 %v372
  %400 = vmatprep.subr.mxu0 0.0
  %401 = vmatpush1.msra.mxu0 %v373
  %402 = vmatprep.subr.mxu0 0.0
  %403 = vmatpush1.msra.mxu0 %v374
  %404 = vmatprep.subr.mxu0 0.0
  %405 = vmatpush1.msra.mxu0 %v375
  %406 = vmatprep.subr.mxu0 0.0
  %407 = vmatpush1.msra.mxu0 %v376
  %408 = vmatprep.subr.mxu0 0.0
  %409 = vmatpush1.msra.mxu0 %v377
  %410 = vmatprep.subr.mxu0 0.0
  %411 = vmatpush1.msra.mxu0 0.0
  %412 = vmatprep.subr.mxu0 0.0
  %413 = vmatpush1.msra.mxu0 0.0
  %414 = vmatprep.subr.mxu0 0.0
  %415 = vmatpush1.msra.mxu0 0.0
  %416 = vmatprep.subr.mxu0 0.0
  %417 = vmatpush1.msra.mxu0 0.0
  %418 = vmatprep.subr.mxu0 0.0
  %419 = vmatpush1.msra.mxu0 0.0
  %420 = vmatprep.subr.mxu0 0.0
  %421 = vmatpush1.msra.mxu0 0.0
  %422 = vmatprep.subr.mxu0 0.0
  %423 = vmatpush1.msra.mxu0 0.0
  %424 = vmatprep.subr.mxu0 0.0
  %425 = vmatpush1.msra.mxu0 0.0
  %426 = vmatprep.subr.mxu0 0.0
  %427 = vmatpush1.msra.mxu0 0.0
  %428 = vmatprep.subr.mxu0 0.0
  %429 = vmatpush1.msra.mxu0 0.0
  %430 = vmatprep.subr.mxu0 0.0
  %431 = vmatpush1.msra.mxu0 0.0
  %432 = vmatprep.subr.mxu0 0.0
  %433 = vmatpush1.msra.mxu0 0.0
  %434 = vmatprep.subr.mxu0 0.0
  %435 = vmatpush1.msra.mxu0 0.0
  %436 = vmatprep.subr.mxu0 0.0
  %437 = vmatpush1.msra.mxu0 0.0
  %438 = vmatprep.subr.mxu0 0.0
  %439 = vmatpush1.msra.mxu0 0.0
  %440 = vmatprep.subr.mxu0 0.0
  %441 = vmatpush1.msra.mxu0 0.0
  %442 = vmatprep.mubr.f32.mxu0 0.0
  %443 = vmatmul.mubr.f32.gmra.mrb[0].mxu0 %v17
  %v444 = vpop.f32.mrb[0].mxu0
  %v445 = vadd.f32 0.0, %v444
  %v446 = vpop.f32.mrb[0].mxu0
  %447 = vmatprep.mubr.f32.mxu0 0.0
  %448 = vmatmul.mubr.f32.gmra.mrb[0].mxu0 %v18
  %v449 = vpop.f32.mrb[0].mxu0
  %v450 = vadd.f32 0.0, %v449
  %v451 = vpop.f32.mrb[0].mxu0
  %452 = vmatprep.mubr.f32.mxu0 0.0
  %453 = vmatmul.mubr.f32.gmra.mrb[0].mxu0 %v19
  %v454 = vpop.f32.mrb[0].mxu0
  %v455 = vadd.f32 0.0, %v454
  %v456 = vpop.f32.mrb[0].mxu0
  %457 = vmatprep.mubr.f32.mxu0 0.0
  %458 = vmatmul.mubr.f32.gmra.mrb[0].mxu0 %v20
  %v459 = vpop.f32.mrb[0].mxu0
  %v460 = vadd.f32 0.0, %v459
  %v461 = vpop.f32.mrb[0].mxu0
  %462 = vmatprep.mubr.f32.mxu0 0.0
  %463 = vmatmul.mubr.f32.gmra.mrb[0].mxu0 %v21
  %v464 = vpop.f32.mrb[0].mxu0
  %v465 = vadd.f32 0.0, %v464
  %v466 = vpop.f32.mrb[0].mxu0
  %467 = vmatprep.mubr.f32.mxu0 0.0
  %468 = vmatmul.mubr.f32.gmra.mrb[0].mxu0 %v22
  %v469 = vpop.f32.mrb[0].mxu0
  %v470 = vadd.f32 0.0, %v469
  %v471 = vpop.f32.mrb[0].mxu0
  %472 = vmatprep.mubr.f32.mxu0 0.0
  %473 = vmatmul.mubr.f32.gmra.mrb[0].mxu0 %v23
  %v474 = vpop.f32.mrb[0].mxu0
  %v475 = vadd.f32 0.0, %v474
  %v476 = vpop.f32.mrb[0].mxu0
  %477 = vmatprep.mubr.f32.mxu0 0.0
  %478 = vmatmul.mubr.f32.gmra.mrb[0].mxu0 %v24
  %v479 = vpop.f32.mrb[0].mxu0
  %v480 = vadd.f32 0.0, %v479
  %v481 = vpop.f32.mrb[0].mxu0
  %482 = vmatprep.mubr.f32.mxu0 0.0
  %483 = vmatmul.mubr.f32.gmra.mrb[0].mxu0 %v25
  %v484 = vpop.f32.mrb[0].mxu0
  %v485 = vadd.f32 0.0, %v484
  %v486 = vpop.f32.mrb[0].mxu0
  %487 = vmatprep.mubr.f32.mxu0 0.0
  %488 = vmatmul.mubr.f32.gmra.mrb[0].mxu0 %v26
  %v489 = vpop.f32.mrb[0].mxu0
  %v490 = vadd.f32 0.0, %v489
  %v491 = vpop.f32.mrb[0].mxu0
  %492 = vmatprep.mubr.f32.mxu0 0.0
  %493 = vmatmul.mubr.f32.gmra.mrb[0].mxu0 %v27
  %v494 = vpop.f32.mrb[0].mxu0
  %v495 = vadd.f32 0.0, %v494
  %v496 = vpop.f32.mrb[0].mxu0
  %497 = vmatprep.mubr.f32.mxu0 0.0
  %498 = vmatmul.mubr.f32.gmra.mrb[0].mxu0 %v28
  %v499 = vpop.f32.mrb[0].mxu0
  %v500 = vadd.f32 0.0, %v499
  %v501 = vpop.f32.mrb[0].mxu0
  %502 = vmatprep.mubr.f32.mxu0 0.0
  %503 = vmatmul.mubr.f32.gmra.mrb[0].mxu0 %v29
  %v504 = vpop.f32.mrb[0].mxu0
  %v505 = vadd.f32 0.0, %v504
  %v506 = vpop.f32.mrb[0].mxu0
  %507 = vmatprep.mubr.f32.mxu0 0.0
  %508 = vmatmul.mubr.f32.gmra.mrb[0].mxu0 %v30
  %v509 = vpop.f32.mrb[0].mxu0
  %v510 = vadd.f32 0.0, %v509
  %v511 = vpop.f32.mrb[0].mxu0
  %512 = vmatprep.mubr.f32.mxu0 0.0
  %513 = vmatmul.mubr.f32.gmra.mrb[0].mxu0 %v31
  %v514 = vpop.f32.mrb[0].mxu0
  %v515 = vadd.f32 0.0, %v514
  %v516 = vpop.f32.mrb[0].mxu0
  %517 = vmatprep.mubr.f32.mxu0 0.0
  %518 = vmatmul.mubr.f32.gmra.mrb[0].mxu0 %v32
  %v519 = vpop.f32.mrb[0].mxu0
  %v520 = vadd.f32 0.0, %v519
  %v521 = vpop.f32.mrb[0].mxu0
  %522 = vdwg.mxu0
  %s523 = scalar_lea.vmem %s2, 128
  %v524 = vld [vmem:[%s523] sm:$0xff]
  %v525 = vld [vmem:[%s523 + $0x8] sm:$0xff]
  %v526 = vld [vmem:[%s523 + $0x10] sm:$0xff]
  %v527 = vld [vmem:[%s523 + $0x18] sm:$0xff]
  %v528 = vld [vmem:[%s523 + $0x20] sm:$0xff]
  %v529 = vld [vmem:[%s523 + $0x28] sm:$0xff]
  %v530 = vld [vmem:[%s523 + $0x30] sm:$0xff]
  %v531 = vld [vmem:[%s523 + $0x38] sm:$0xff]
  %v532 = vld [vmem:[%s523 + $0x40] sm:$0xff]
  %v533 = vld [vmem:[%s523 + $0x48] sm:$0xff]
  %v534 = vld [vmem:[%s523 + $0x50] sm:$0xff]
  %v535 = vld [vmem:[%s523 + $0x58] sm:$0xff]
  %v536 = vld [vmem:[%s523 + $0x60] sm:$0xff]
  %v537 = vld [vmem:[%s523 + $0x68] sm:$0xff]
  %v538 = vld [vmem:[%s523 + $0x70] sm:$0xff]
  %v539 = vld [vmem:[%s523 + $0x78] sm:$0xff]
  %s540 = scalar_lea.vmem %s3, 1
  %v541 = vld [vmem:[%s540] sm:$0x1]
  %v543 = vlaneseq
  %v544 = vshrl.u32 %v543, 7
  %v545 = vsub.s32 0, %v544
  %v546 = vrot.slane %v541, %v545
  %548 = vmatprep.subr.mxu0 0.0
  %549 = vmatpush1.msra.mxu0 %v524
  %550 = vmatprep.subr.mxu0 0.0
  %551 = vmatpush1.msra.mxu0 %v525
  %552 = vmatprep.subr.mxu0 0.0
  %553 = vmatpush1.msra.mxu0 %v526
  %554 = vmatprep.subr.mxu0 0.0
  %555 = vmatpush1.msra.mxu0 %v527
  %556 = vmatprep.subr.mxu0 0.0
  %557 = vmatpush1.msra.mxu0 %v528
  %558 = vmatprep.subr.mxu0 0.0
  %559 = vmatpush1.msra.mxu0 %v529
  %560 = vmatprep.subr.mxu0 0.0
  %561 = vmatpush1.msra.mxu0 %v530
  %562 = vmatprep.subr.mxu0 0.0
  %563 = vmatpush1.msra.mxu0 %v531
  %564 = vmatprep.subr.mxu0 0.0
  %565 = vmatpush1.msra.mxu0 %v532
  %566 = vmatprep.subr.mxu0 0.0
  %567 = vmatpush1.msra.mxu0 %v533
  %568 = vmatprep.subr.mxu0 0.0
  %569 = vmatpush1.msra.mxu0 %v534
  %570 = vmatprep.subr.mxu0 0.0
  %571 = vmatpush1.msra.mxu0 %v535
  %572 = vmatprep.subr.mxu0 0.0
  %573 = vmatpush1.msra.mxu0 %v536
  %574 = vmatprep.subr.mxu0 0.0
  %575 = vmatpush1.msra.mxu0 %v537
  %576 = vmatprep.subr.mxu0 0.0
  %577 = vmatpush1.msra.mxu0 %v538
  %578 = vmatprep.subr.mxu0 0.0
  %579 = vmatpush1.msra.mxu0 %v539
  %580 = vmatprep.subr.mxu0 0.0
  %581 = vmatpush1.msra.mxu0 0.0
  %582 = vmatprep.subr.mxu0 0.0
  %583 = vmatpush1.msra.mxu0 0.0
  %584 = vmatprep.subr.mxu0 0.0
  %585 = vmatpush1.msra.mxu0 0.0
  %586 = vmatprep.subr.mxu0 0.0
  %587 = vmatpush1.msra.mxu0 0.0
  %588 = vmatprep.subr.mxu0 0.0
  %589 = vmatpush1.msra.mxu0 0.0
  %590 = vmatprep.subr.mxu0 0.0
  %591 = vmatpush1.msra.mxu0 0.0
  %592 = vmatprep.subr.mxu0 0.0
  %593 = vmatpush1.msra.mxu0 0.0
  %594 = vmatprep.subr.mxu0 0.0
  %595 = vmatpush1.msra.mxu0 0.0
  %596 = vmatprep.subr.mxu0 0.0
  %597 = vmatpush1.msra.mxu0 0.0
  %598 = vmatprep.subr.mxu0 0.0
  %599 = vmatpush1.msra.mxu0 0.0
  %600 = vmatprep.subr.mxu0 0.0
  %601 = vmatpush1.msra.mxu0 0.0
  %602 = vmatprep.subr.mxu0 0.0
  %603 = vmatpush1.msra.mxu0 0.0
  %604 = vmatprep.subr.mxu0 0.0
  %605 = vmatpush1.msra.mxu0 0.0
  %606 = vmatprep.subr.mxu0 0.0
  %607 = vmatpush1.msra.mxu0 0.0
  %608 = vmatprep.subr.mxu0 0.0
  %609 = vmatpush1.msra.mxu0 0.0
  %610 = vmatprep.subr.mxu0 0.0
  %611 = vmatpush1.msra.mxu0 0.0
  %612 = vmatprep.mubr.f32.mxu0 0.0
  %613 = vmatmul.mubr.f32.gmra.mrb[0].mxu0 %v445
  %v614 = vpop.f32.mrb[0].mxu0
  %v615 = vadd.f32 %v546, %v614
  %v616 = vpop.f32.mrb[0].mxu0
  %617 = vmatprep.mubr.f32.mxu0 0.0
  %618 = vmatmul.mubr.f32.gmra.mrb[0].mxu0 %v450
  %v619 = vpop.f32.mrb[0].mxu0
  %v620 = vadd.f32 %v546, %v619
  %v621 = vpop.f32.mrb[0].mxu0
  %622 = vmatprep.mubr.f32.mxu0 0.0
  %623 = vmatmul.mubr.f32.gmra.mrb[0].mxu0 %v455
  %v624 = vpop.f32.mrb[0].mxu0
  %v625 = vadd.f32 %v546, %v624
  %v626 = vpop.f32.mrb[0].mxu0
  %627 = vmatprep.mubr.f32.mxu0 0.0
  %628 = vmatmul.mubr.f32.gmra.mrb[0].mxu0 %v460
  %v629 = vpop.f32.mrb[0].mxu0
  %v630 = vadd.f32 %v546, %v629
  %v631 = vpop.f32.mrb[0].mxu0
  %632 = vmatprep.mubr.f32.mxu0 0.0
  %633 = vmatmul.mubr.f32.gmra.mrb[0].mxu0 %v465
  %v634 = vpop.f32.mrb[0].mxu0
  %v635 = vadd.f32 %v546, %v634
  %v636 = vpop.f32.mrb[0].mxu0
  %637 = vmatprep.mubr.f32.mxu0 0.0
  %638 = vmatmul.mubr.f32.gmra.mrb[0].mxu0 %v470
  %v639 = vpop.f32.mrb[0].mxu0
  %v640 = vadd.f32 %v546, %v639
  %v641 = vpop.f32.mrb[0].mxu0
  %642 = vmatprep.mubr.f32.mxu0 0.0
  %643 = vmatmul.mubr.f32.gmra.mrb[0].mxu0 %v475
  %v644 = vpop.f32.mrb[0].mxu0
  %v645 = vadd.f32 %v546, %v644
  %v646 = vpop.f32.mrb[0].mxu0
  %647 = vmatprep.mubr.f32.mxu0 0.0
  %648 = vmatmul.mubr.f32.gmra.mrb[0].mxu0 %v480
  %v649 = vpop.f32.mrb[0].mxu0
  %v650 = vadd.f32 %v546, %v649
  %v651 = vpop.f32.mrb[0].mxu0
  %652 = vmatprep.mubr.f32.mxu0 0.0
  %653 = vmatmul.mubr.f32.gmra.mrb[0].mxu0 %v485
  %v654 = vpop.f32.mrb[0].mxu0
  %v655 = vadd.f32 %v546, %v654
  %v656 = vpop.f32.mrb[0].mxu0
  %657 = vmatprep.mubr.f32.mxu0 0.0
  %658 = vmatmul.mubr.f32.gmra.mrb[0].mxu0 %v490
  %v659 = vpop.f32.mrb[0].mxu0
  %v660 = vadd.f32 %v546, %v659
  %v661 = vpop.f32.mrb[0].mxu0
  %662 = vmatprep.mubr.f32.mxu0 0.0
  %663 = vmatmul.mubr.f32.gmra.mrb[0].mxu0 %v495
  %v664 = vpop.f32.mrb[0].mxu0
  %v665 = vadd.f32 %v546, %v664
  %v666 = vpop.f32.mrb[0].mxu0
  %667 = vmatprep.mubr.f32.mxu0 0.0
  %668 = vmatmul.mubr.f32.gmra.mrb[0].mxu0 %v500
  %v669 = vpop.f32.mrb[0].mxu0
  %v670 = vadd.f32 %v546, %v669
  %v671 = vpop.f32.mrb[0].mxu0
  %672 = vmatprep.mubr.f32.mxu0 0.0
  %673 = vmatmul.mubr.f32.gmra.mrb[0].mxu0 %v505
  %v674 = vpop.f32.mrb[0].mxu0
  %v675 = vadd.f32 %v546, %v674
  %v676 = vpop.f32.mrb[0].mxu0
  %677 = vmatprep.mubr.f32.mxu0 0.0
  %678 = vmatmul.mubr.f32.gmra.mrb[0].mxu0 %v510
  %v679 = vpop.f32.mrb[0].mxu0
  %v680 = vadd.f32 %v546, %v679
  %v681 = vpop.f32.mrb[0].mxu0
  %682 = vmatprep.mubr.f32.mxu0 0.0
  %683 = vmatmul.mubr.f32.gmra.mrb[0].mxu0 %v515
  %v684 = vpop.f32.mrb[0].mxu0
  %v685 = vadd.f32 %v546, %v684
  %v686 = vpop.f32.mrb[0].mxu0
  %687 = vmatprep.mubr.f32.mxu0 0.0
  %688 = vmatmul.mubr.f32.gmra.mrb[0].mxu0 %v520
  %v689 = vpop.f32.mrb[0].mxu0
  %v690 = vadd.f32 %v546, %v689
  %v691 = vpop.f32.mrb[0].mxu0
  %692 = vdwg.mxu0
  %693 = vst [vmem:[%s4] sm:$0xff] %v615
  %694 = vst [vmem:[%s4 + $0x8] sm:$0xff] %v620
  %695 = vst [vmem:[%s4 + $0x10] sm:$0xff] %v625
  %696 = vst [vmem:[%s4 + $0x18] sm:$0xff] %v630
  %697 = vst [vmem:[%s4 + $0x20] sm:$0xff] %v635
  %698 = vst [vmem:[%s4 + $0x28] sm:$0xff] %v640
  %699 = vst [vmem:[%s4 + $0x30] sm:$0xff] %v645
  %700 = vst [vmem:[%s4 + $0x38] sm:$0xff] %v650
  %701 = vst [vmem:[%s4 + $0x40] sm:$0xff] %v655
  %702 = vst [vmem:[%s4 + $0x48] sm:$0xff] %v660
  %703 = vst [vmem:[%s4 + $0x50] sm:$0xff] %v665
  %704 = vst [vmem:[%s4 + $0x58] sm:$0xff] %v670
  %705 = vst [vmem:[%s4 + $0x60] sm:$0xff] %v675
  %706 = vst [vmem:[%s4 + $0x68] sm:$0xff] %v680
  %707 = vst [vmem:[%s4 + $0x70] sm:$0xff] %v685
  %708 = vst [vmem:[%s4 + $0x78] sm:$0xff] %v690
  // Predicated region
  $region18: #{gcn_forward.1} parent=0 // pred_check
    _
  $region19: #{gcn_forward.1} parent=0 // pred_check_branch
    %710 = sbr.rel (0) target = $region21
  $region20: #{gcn_forward.1} parent=0 // pred_region
    _
  $region21: #{gcn_forward.1} parent=0 // pred_fallthru
    _
  // Predicated region
  $region22: #{gcn_forward.1} parent=0 // pred_check
    _
  $region23: #{gcn_forward.1} parent=0 // pred_check_branch
    %712 = sbr.rel (0) target = $region25
  $region24: #{gcn_forward.1} parent=0 // pred_region
    _
  $region25: #{gcn_forward.1} parent=0 // pred_fallthru
    _

</llo_original>
